<compile_context>
chip_gen: v7x
topology: tpu7x:2x2x1
jax: 0.10.0
libtpu: 0.0.40
codegen_flags: <defaults>
</compile_context>

<pallas_src>
import functools

import jax
import jax.numpy as jnp
from jax.experimental import pallas as pl
from jax.experimental.pallas import tpu as pltpu

HIDDEN = 64      # true hidden width of the PyTorch module
H_PAD = 128      # hidden padded to a full lane width (zero-padded, numerically inert)
OUT_PAD = 128    # matmul output width on the MXU; only the real columns are stored


def _round_up(x, m):
    return (x + m - 1) // m * m


def _cdiv(a, b):
    return (a + b - 1) // b


def dqn_kernel(x_ref, w1_ref, b1_ref, w2_ref, b2_ref, w3_ref, b3_ref, o_ref, *, out_cols):
    # x tile arrives as f32 and is cast to bf16 on the VPU (free slot); weights are
    # bf16 and resident across grid steps; all matmuls accumulate in f32 on the MXU.
    x = x_ref[...].astype(jnp.bfloat16)
    h1 = jnp.dot(x, w1_ref[...], preferred_element_type=jnp.float32) + b1_ref[...]
    h1 = jnp.maximum(h1, 0.0).astype(jnp.bfloat16)
    h2 = jnp.dot(h1, w2_ref[...], preferred_element_type=jnp.float32) + b2_ref[...]
    h2 = jnp.maximum(h2, 0.0).astype(jnp.bfloat16)
    h3 = jnp.dot(h2, w3_ref[...], preferred_element_type=jnp.float32) + b3_ref[...]
    # Store only the real output columns (masked vst in VMEM is cheap; the HBM
    # writeback is now out_cols wide instead of 128).  Padded w3/b3 columns are zero
    # by construction and are simply never stored.
    o_ref[...] = h3[:, :out_cols]


@functools.partial(jax.jit, static_argnames=("output_size", "tb"))
def dqn_forward(x, params, output_size, tb=2048):
    """Fused DQN forward.  Whole batch in one pallas_call, tiled along batch."""
    w1, b1, w2, b2, w3, b3 = params
    B, in_size = x.shape

    # Balanced batch tiling: ceil(B/tb) roughly-equal tiles, >= 2 when possible so the
    # "parallel" grid axis feeds both v7x TensorCores; each tile a multiple of 8 rows.
    n_tiles = _cdiv(B, tb)
    if B >= 16:
        n_tiles = max(n_tiles, 2)
    TB = _round_up(_cdiv(B, n_tiles), 8)
    Bp = n_tiles * TB

    x_p = x if Bp == B else jnp.pad(x, ((0, Bp - B), (0, 0)))

    def resident(shape):
        # Constant block index -> fetched once; single-buffered (no need to pipeline).
        return pl.BlockSpec(shape, lambda i: (0, 0), pipeline_mode=pl.Buffered(1))

    flops = 2 * Bp * (in_size * H_PAD + H_PAD * H_PAD + H_PAD * OUT_PAD)
    bytes_accessed = (
        Bp * in_size * 4                                            # x (f32 in)
        + Bp * output_size * 4                                      # narrow f32 out
        + (in_size * H_PAD + H_PAD * H_PAD + H_PAD * OUT_PAD) * 2   # weights (bf16)
        + (H_PAD + H_PAD + OUT_PAD) * 4                             # biases (f32)
    )

    out = pl.pallas_call(
        functools.partial(dqn_kernel, out_cols=output_size),
        out_shape=jax.ShapeDtypeStruct((Bp, output_size), jnp.float32),
        grid=(n_tiles,),
        in_specs=[
            pl.BlockSpec((TB, in_size), lambda i: (i, 0)),  # x: tiled along batch
            resident(w1.shape), resident(b1.shape),
            resident(w2.shape), resident(b2.shape),
            resident(w3.shape), resident(b3.shape),
        ],
        # Narrow output block: last dim equals the full array dim, so it is legal and
        # each (TB, output_size) block is a contiguous row range in HBM.
        out_specs=pl.BlockSpec((TB, output_size), lambda i: (i, 0)),
        compiler_params=pltpu.CompilerParams(
            dimension_semantics=("parallel",),   # shard batch tiles across v7x's 2 TCs
        ),
        cost_estimate=pl.CostEstimate(
            flops=flops, transcendentals=0, bytes_accessed=bytes_accessed
        ),
    )(x_p, w1, b1, w2, b2, w3, b3)

    return out if Bp == B else out[:B]


def init_params(key, input_size, output_size):
    """nn.Linear-style init U(-1/sqrt(fan_in), +1/sqrt(fan_in)).

    Returns (kernel_params, ref_params):
      kernel_params: zero-padded, pre-transposed bf16 weights (+ f32 biases) for the
                     kernel.  Zero padding is a correctness invariant: padded hidden
                     columns stay exactly zero and padded output columns are never
                     stored by the kernel.
      ref_params:    unpadded f32 weights/biases for the pure-JAX reference.
    """
    dims = [(input_size, HIDDEN), (HIDDEN, HIDDEN), (HIDDEN, output_size)]
    pads = [(input_size, H_PAD), (H_PAD, H_PAD), (H_PAD, OUT_PAD)]
    kernel_params, ref_params = [], []
    for (fan_in, fan_out), (pi, po) in zip(dims, pads):
        key, kw, kb = jax.random.split(key, 3)
        bound = 1.0 / (fan_in ** 0.5)
        w = jax.random.uniform(kw, (fan_in, fan_out), jnp.float32, -bound, bound)
        b = jax.random.uniform(kb, (fan_out,), jnp.float32, -bound, bound)
        ref_params += [w, b]
        w_pad = (
            jnp.zeros((pi, po), jnp.float32).at[:fan_in, :fan_out].set(w)
        ).astype(jnp.bfloat16)                       # cast once at init, not per call
        b_pad = jnp.zeros((1, po), jnp.float32).at[0, :fan_out].set(b)
        kernel_params += [w_pad, b_pad]
    return tuple(kernel_params), tuple(ref_params)


def dqn_reference(x, params):
    """Pure-JAX reference mirroring the kernel's quantization: x, weights, and the
    intermediate activations are rounded to bf16; accumulation / bias-add in f32."""
    w1, b1, w2, b2, w3, b3 = params
    q = lambda a: a.astype(jnp.bfloat16).astype(jnp.float32)
    h1 = q(jnp.maximum(q(x) @ q(w1) + b1, 0.0))
    h2 = q(jnp.maximum(h1 @ q(w2) + b2, 0.0))
    return h2 @ q(w3) + b3


if __name__ == "__main__":
    key = jax.random.PRNGKey(0)
    # Small but non-trivial: batch not a multiple of 8 (exercises padding) and the
    # >=2-tile rule gives 2 grid steps (exercises weight residency + pipelining +
    # the parallel batch axis).
    batch, input_size, output_size = 50, 16, 4

    kx, kp = jax.random.split(key)
    x = jax.random.normal(kx, (batch, input_size), dtype=jnp.float32)
    kernel_params, ref_params = init_params(kp, input_size, output_size)

    out = dqn_forward(x, kernel_params, output_size)
    out = jax.block_until_ready(out)

    ref = dqn_reference(x, ref_params)

    assert out.shape == (batch, output_size)
    assert jnp.allclose(out, ref, atol=2e-3, rtol=2e-3), "mismatch vs JAX reference"

    print("KERNEL_OK")
</pallas_src>

<mosaic_0001>
module attributes {stable_mosaic.version = 11 : i64} {
  func.func @dqn_kernel(%arg0: i32, %arg1: memref<32x16xf32, #tpu.memory_space<vmem>>, %arg2: memref<16x128xbf16, #tpu.memory_space<vmem>>, %arg3: memref<1x128xf32, #tpu.memory_space<vmem>>, %arg4: memref<128x128xbf16, #tpu.memory_space<vmem>>, %arg5: memref<1x128xf32, #tpu.memory_space<vmem>>, %arg6: memref<128x128xbf16, #tpu.memory_space<vmem>>, %arg7: memref<1x128xf32, #tpu.memory_space<vmem>>, %arg8: memref<32x4xf32, #tpu.memory_space<vmem>>) attributes {dimension_semantics = [#tpu.dimension_semantics<parallel>], iteration_bounds = array<i64: 2>, scalar_prefetch = 0 : i64, scratch_operands = 0 : i64, tpu.core_type = #tpu.core_type<tc>, window_params = [{transform_indices = @transform_0, window_bounds = array<i64: 32, 16>}, {pipeline_mode = #tpu.pipeline_mode<synchronous>, transform_indices = @transform_1, window_bounds = array<i64: 16, 128>}, {pipeline_mode = #tpu.pipeline_mode<synchronous>, transform_indices = @transform_2, window_bounds = array<i64: 1, 128>}, {pipeline_mode = #tpu.pipeline_mode<synchronous>, transform_indices = @transform_3, window_bounds = array<i64: 128, 128>}, {pipeline_mode = #tpu.pipeline_mode<synchronous>, transform_indices = @transform_4, window_bounds = array<i64: 1, 128>}, {pipeline_mode = #tpu.pipeline_mode<synchronous>, transform_indices = @transform_5, window_bounds = array<i64: 128, 128>}, {pipeline_mode = #tpu.pipeline_mode<synchronous>, transform_indices = @transform_6, window_bounds = array<i64: 1, 128>}, {transform_indices = @transform_7, window_bounds = array<i64: 32, 4>}]} {
    %c0 = arith.constant 0 : index
    %c0_0 = arith.constant 0 : index
    %0 = vector.load %arg1[%c0, %c0_0] : memref<32x16xf32, #tpu.memory_space<vmem>>, vector<32x16xf32>
    %1 = arith.truncf %0 : vector<32x16xf32> to vector<32x16xbf16>
    %c0_1 = arith.constant 0 : index
    %c0_2 = arith.constant 0 : index
    %2 = vector.load %arg2[%c0_1, %c0_2] : memref<16x128xbf16, #tpu.memory_space<vmem>>, vector<16x128xbf16>
    %cst = arith.constant dense<0.000000e+00> : vector<32x128xf32>
    %3 = tpu.matmul %1, %2, %cst {dimension_numbers = #tpu.dot_dimension_numbers<[1], [0], [0], [1], [0, 0, 1, 1], [], []>} : vector<32x16xbf16>, vector<16x128xbf16>, vector<32x128xf32> -> vector<32x128xf32>
    %c0_3 = arith.constant 0 : index
    %c0_4 = arith.constant 0 : index
    %4 = vector.load %arg3[%c0_3, %c0_4] : memref<1x128xf32, #tpu.memory_space<vmem>>, vector<1x128xf32>
    %5 = vector.broadcast %4 : vector<1x128xf32> to vector<32x128xf32>
    %6 = arith.addf %3, %5 : vector<32x128xf32>
    %cst_5 = arith.constant 0.000000e+00 : f32
    %7 = vector.broadcast %cst_5 : f32 to vector<32x128xf32>
    %8 = arith.maximumf %6, %7 : vector<32x128xf32>
    %9 = arith.truncf %8 : vector<32x128xf32> to vector<32x128xbf16>
    %c0_6 = arith.constant 0 : index
    %c0_7 = arith.constant 0 : index
    %10 = vector.load %arg4[%c0_6, %c0_7] : memref<128x128xbf16, #tpu.memory_space<vmem>>, vector<128x128xbf16>
    %cst_8 = arith.constant dense<0.000000e+00> : vector<32x128xf32>
    %11 = tpu.matmul %9, %10, %cst_8 {dimension_numbers = #tpu.dot_dimension_numbers<[1], [0], [0], [1], [0, 0, 1, 1], [], []>} : vector<32x128xbf16>, vector<128x128xbf16>, vector<32x128xf32> -> vector<32x128xf32>
    %c0_9 = arith.constant 0 : index
    %c0_10 = arith.constant 0 : index
    %12 = vector.load %arg5[%c0_9, %c0_10] : memref<1x128xf32, #tpu.memory_space<vmem>>, vector<1x128xf32>
    %13 = vector.broadcast %12 : vector<1x128xf32> to vector<32x128xf32>
    %14 = arith.addf %11, %13 : vector<32x128xf32>
    %cst_11 = arith.constant 0.000000e+00 : f32
    %15 = vector.broadcast %cst_11 : f32 to vector<32x128xf32>
    %16 = arith.maximumf %14, %15 : vector<32x128xf32>
    %17 = arith.truncf %16 : vector<32x128xf32> to vector<32x128xbf16>
    %c0_12 = arith.constant 0 : index
    %c0_13 = arith.constant 0 : index
    %18 = vector.load %arg6[%c0_12, %c0_13] : memref<128x128xbf16, #tpu.memory_space<vmem>>, vector<128x128xbf16>
    %cst_14 = arith.constant dense<0.000000e+00> : vector<32x128xf32>
    %19 = tpu.matmul %17, %18, %cst_14 {dimension_numbers = #tpu.dot_dimension_numbers<[1], [0], [0], [1], [0, 0, 1, 1], [], []>} : vector<32x128xbf16>, vector<128x128xbf16>, vector<32x128xf32> -> vector<32x128xf32>
    %c0_15 = arith.constant 0 : index
    %c0_16 = arith.constant 0 : index
    %20 = vector.load %arg7[%c0_15, %c0_16] : memref<1x128xf32, #tpu.memory_space<vmem>>, vector<1x128xf32>
    %21 = vector.broadcast %20 : vector<1x128xf32> to vector<32x128xf32>
    %22 = arith.addf %19, %21 : vector<32x128xf32>
    %23 = vector.extract_strided_slice %22 {offsets = [0, 0], sizes = [32, 4], strides = [1, 1]} : vector<32x128xf32> to vector<32x4xf32>
    %c0_17 = arith.constant 0 : index
    %c0_18 = arith.constant 0 : index
    %24 = vector.load %arg8[%c0_17, %c0_18] : memref<32x4xf32, #tpu.memory_space<vmem>>, vector<32x4xf32>
    tpu.vector_store %arg8[%c0_17, %c0_18], %23 {strides = array<i32>} : memref<32x4xf32, #tpu.memory_space<vmem>>, vector<32x4xf32>,
    return
  }
  func.func @transform_0(%arg0: i32) -> (i32, i32) {
    %c0_i32 = arith.constant 0 : i32
    %c0_i32_0 = arith.constant 0 : i32
    return %arg0, %c0_i32 : i32, i32
  }
  func.func @transform_1(%arg0: i32) -> (i32, i32) {
    %c0_i32 = arith.constant 0 : i32
    %c0_i32_0 = arith.constant 0 : i32
    %c0_i32_1 = arith.constant 0 : i32
    return %c0_i32, %c0_i32_0 : i32, i32
  }
  func.func @transform_2(%arg0: i32) -> (i32, i32) {
    %c0_i32 = arith.constant 0 : i32
    %c0_i32_0 = arith.constant 0 : i32
    %c0_i32_1 = arith.constant 0 : i32
    return %c0_i32, %c0_i32_0 : i32, i32
  }
  func.func @transform_3(%arg0: i32) -> (i32, i32) {
    %c0_i32 = arith.constant 0 : i32
    %c0_i32_0 = arith.constant 0 : i32
    %c0_i32_1 = arith.constant 0 : i32
    return %c0_i32, %c0_i32_0 : i32, i32
  }
  func.func @transform_4(%arg0: i32) -> (i32, i32) {
    %c0_i32 = arith.constant 0 : i32
    %c0_i32_0 = arith.constant 0 : i32
    %c0_i32_1 = arith.constant 0 : i32
    return %c0_i32, %c0_i32_0 : i32, i32
  }
  func.func @transform_5(%arg0: i32) -> (i32, i32) {
    %c0_i32 = arith.constant 0 : i32
    %c0_i32_0 = arith.constant 0 : i32
    %c0_i32_1 = arith.constant 0 : i32
    return %c0_i32, %c0_i32_0 : i32, i32
  }
  func.func @transform_6(%arg0: i32) -> (i32, i32) {
    %c0_i32 = arith.constant 0 : i32
    %c0_i32_0 = arith.constant 0 : i32
    %c0_i32_1 = arith.constant 0 : i32
    return %c0_i32, %c0_i32_0 : i32, i32
  }
  func.func @transform_7(%arg0: i32) -> (i32, i32) {
    %c0_i32 = arith.constant 0 : i32
    %c0_i32_0 = arith.constant 0 : i32
    return %arg0, %c0_i32 : i32, i32
  }
}

</mosaic_0001>

<llo_original>
// kernel: dqn_forward.1
$region0: #{dqn_forward.1}
  #allocation0 [shape = 'u32[]', space=smem, size = 0x4, offset = 0x4, fixed_abs, tag = 'smem constant byte address 0x4 - core index']
  #allocation1 [shape = 'u32[144,128]{1,0:T(1,128)}', space=vmem, size = 0x12000, scoped, tag = 'internal scratch']
  %s0 = inlined_call_operand.vmem [shape: f32[64,16], index: 0, kind: input, shape index: {}]
  %s1 = inlined_call_operand.vmem [shape: bf16[16,128], index: 1, kind: input, shape index: {}]
  %s2 = inlined_call_operand.vmem [shape: f32[1,128], index: 2, kind: input, shape index: {}]
  %s3 = inlined_call_operand.vmem [shape: bf16[128,128], index: 3, kind: input, shape index: {}]
  %s4 = inlined_call_operand.vmem [shape: f32[1,128], index: 4, kind: input, shape index: {}]
  %s5 = inlined_call_operand.vmem [shape: bf16[128,128], index: 5, kind: input, shape index: {}]
  %s6 = inlined_call_operand.vmem [shape: f32[1,128], index: 6, kind: input, shape index: {}]
  %s7 = inlined_call_operand.vmem [shape: f32[64,4], index: 7, kind: output, shape index: {}]
  %s8 = sld [smem:[#allocation0]]
  $region61: #{dqn_forward.1} parent=0
    _
  %s10 = ssub.s32 1, %s8
  %s11 = scalar_select 0, %s10, %s8
  loop: start=0, step=1, limit=4
  $region2: #{dqn_forward.1} parent=0 // loop_pre_header
    _
  $region3: #{dqn_forward.1} parent=0 // loop_header
    %s13 = sphi 0, %s17
    %p14 = scmp.ge.s32.totalorder %s13, 4
    %s23 = sphi 0, %s25
    %s26 = sphi 0, %s23
    %s27 = sphi 0, %s26
    %s43 = sphi 0, %s27
    %s47 = sphi 0, %s47
    %s49 = sphi 0, %s47
    %s50 = sphi 0, %s49
    %s64 = sphi 0, %s50
    %s68 = sphi 0, %s68
    %s70 = sphi 0, %s68
    %s71 = sphi 0, %s70
    %s85 = sphi 0, %s71
    %s89 = sphi 0, %s89
    %s91 = sphi 0, %s89
    %s92 = sphi 0, %s91
    %s106 = sphi 0, %s92
    %s110 = sphi 0, %s110
    %s112 = sphi 0, %s110
    %s113 = sphi 0, %s112
    %s127 = sphi 0, %s113
    %s131 = sphi 0, %s131
    %s133 = sphi 0, %s131
    %s134 = sphi 0, %s133
    %s148 = sphi 0, %s134
    %s152 = sphi 0, %s152
    %s154 = sphi 0, %s152
    %s155 = sphi 0, %s154
    %s169 = sphi 0, %s155
    %s175 = sphi 0, %s177
    %s178 = sphi 0, %s175
    %s179 = sphi 0, %s178
    %s195 = sphi 0, %s179
  $region4: #{dqn_forward.1} parent=0 // loop_header_branch
    %16 = sbr.rel (%p14) target = $region8
  $region5: #{dqn_forward.1} parent=0 // loop_body
    %s18 = ssub.s32 %s13, 1
    %s19 = ssub.s32 %s13, 2
    %s20 = sadd.s32 %s13, 1
    %s21 = ssub.s32 %s13, %s20
    %p22 = scmp.eq.s32.totalorder %s21, 0
    %s24 = sadd.s32 %s23, 1
    %s25 = scalar_select %p22, %s23, %s24
    %p28 = pneg %p22
    %p29 = scmp.eq.s32.totalorder %s13, 1
    %p30 = por %p28, %p29
    %p31 = scmp.ne.s32.totalorder %s23, %s26
    %p32 = scmp.eq.s32.totalorder %s13, 0
    %p33 = por %p31, %p32
    %p34 = scmp.ne.s32.totalorder %s23, %s26
    %p35 = scmp.eq.s32.totalorder %s18, 1
    %p36 = por %p34, %p35
    %p37 = scmp.ne.s32.totalorder %s26, %s27
    %p38 = scmp.eq.s32.totalorder %s18, 0
    %p39 = por %p37, %p38
    %p40 = scmp.ne.s32.totalorder %s26, %s27
    %p41 = scmp.eq.s32.totalorder %s19, 1
    %p42 = por %p40, %p41
    %p44 = scmp.ne.s32.totalorder %s27, %s43
    %p45 = scmp.eq.s32.totalorder %s19, 0
    %p46 = por %p44, %p45
    %s48 = sadd.s32 %s47, 1
    %p51 = scmp.eq.s32.totalorder %s13, 1
    %p52 = scmp.ne.s32.totalorder %s47, %s49
    %p53 = scmp.eq.s32.totalorder %s13, 0
    %p54 = por %p52, %p53
    %p55 = scmp.ne.s32.totalorder %s47, %s49
    %p56 = scmp.eq.s32.totalorder %s18, 1
    %p57 = por %p55, %p56
    %p58 = scmp.ne.s32.totalorder %s49, %s50
    %p59 = scmp.eq.s32.totalorder %s18, 0
    %p60 = por %p58, %p59
    %p61 = scmp.ne.s32.totalorder %s49, %s50
    %p62 = scmp.eq.s32.totalorder %s19, 1
    %p63 = por %p61, %p62
    %p65 = scmp.ne.s32.totalorder %s50, %s64
    %p66 = scmp.eq.s32.totalorder %s19, 0
    %p67 = por %p65, %p66
    %s69 = sadd.s32 %s68, 1
    %p72 = scmp.eq.s32.totalorder %s13, 1
    %p73 = scmp.ne.s32.totalorder %s68, %s70
    %p74 = scmp.eq.s32.totalorder %s13, 0
    %p75 = por %p73, %p74
    %p76 = scmp.ne.s32.totalorder %s68, %s70
    %p77 = scmp.eq.s32.totalorder %s18, 1
    %p78 = por %p76, %p77
    %p79 = scmp.ne.s32.totalorder %s70, %s71
    %p80 = scmp.eq.s32.totalorder %s18, 0
    %p81 = por %p79, %p80
    %p82 = scmp.ne.s32.totalorder %s70, %s71
    %p83 = scmp.eq.s32.totalorder %s19, 1
    %p84 = por %p82, %p83
    %p86 = scmp.ne.s32.totalorder %s71, %s85
    %p87 = scmp.eq.s32.totalorder %s19, 0
    %p88 = por %p86, %p87
    %s90 = sadd.s32 %s89, 1
    %p93 = scmp.eq.s32.totalorder %s13, 1
    %p94 = scmp.ne.s32.totalorder %s89, %s91
    %p95 = scmp.eq.s32.totalorder %s13, 0
    %p96 = por %p94, %p95
    %p97 = scmp.ne.s32.totalorder %s89, %s91
    %p98 = scmp.eq.s32.totalorder %s18, 1
    %p99 = por %p97, %p98
    %p100 = scmp.ne.s32.totalorder %s91, %s92
    %p101 = scmp.eq.s32.totalorder %s18, 0
    %p102 = por %p100, %p101
    %p103 = scmp.ne.s32.totalorder %s91, %s92
    %p104 = scmp.eq.s32.totalorder %s19, 1
    %p105 = por %p103, %p104
    %p107 = scmp.ne.s32.totalorder %s92, %s106
    %p108 = scmp.eq.s32.totalorder %s19, 0
    %p109 = por %p107, %p108
    %s111 = sadd.s32 %s110, 1
    %p114 = scmp.eq.s32.totalorder %s13, 1
    %p115 = scmp.ne.s32.totalorder %s110, %s112
    %p116 = scmp.eq.s32.totalorder %s13, 0
    %p117 = por %p115, %p116
    %p118 = scmp.ne.s32.totalorder %s110, %s112
    %p119 = scmp.eq.s32.totalorder %s18, 1
    %p120 = por %p118, %p119
    %p121 = scmp.ne.s32.totalorder %s112, %s113
    %p122 = scmp.eq.s32.totalorder %s18, 0
    %p123 = por %p121, %p122
    %p124 = scmp.ne.s32.totalorder %s112, %s113
    %p125 = scmp.eq.s32.totalorder %s19, 1
    %p126 = por %p124, %p125
    %p128 = scmp.ne.s32.totalorder %s113, %s127
    %p129 = scmp.eq.s32.totalorder %s19, 0
    %p130 = por %p128, %p129
    %s132 = sadd.s32 %s131, 1
    %p135 = scmp.eq.s32.totalorder %s13, 1
    %p136 = scmp.ne.s32.totalorder %s131, %s133
    %p137 = scmp.eq.s32.totalorder %s13, 0
    %p138 = por %p136, %p137
    %p139 = scmp.ne.s32.totalorder %s131, %s133
    %p140 = scmp.eq.s32.totalorder %s18, 1
    %p141 = por %p139, %p140
    %p142 = scmp.ne.s32.totalorder %s133, %s134
    %p143 = scmp.eq.s32.totalorder %s18, 0
    %p144 = por %p142, %p143
    %p145 = scmp.ne.s32.totalorder %s133, %s134
    %p146 = scmp.eq.s32.totalorder %s19, 1
    %p147 = por %p145, %p146
    %p149 = scmp.ne.s32.totalorder %s134, %s148
    %p150 = scmp.eq.s32.totalorder %s19, 0
    %p151 = por %p149, %p150
    %s153 = sadd.s32 %s152, 1
    %p156 = scmp.eq.s32.totalorder %s13, 1
    %p157 = scmp.ne.s32.totalorder %s152, %s154
    %p158 = scmp.eq.s32.totalorder %s13, 0
    %p159 = por %p157, %p158
    %p160 = scmp.ne.s32.totalorder %s152, %s154
    %p161 = scmp.eq.s32.totalorder %s18, 1
    %p162 = por %p160, %p161
    %p163 = scmp.ne.s32.totalorder %s154, %s155
    %p164 = scmp.eq.s32.totalorder %s18, 0
    %p165 = por %p163, %p164
    %p166 = scmp.ne.s32.totalorder %s154, %s155
    %p167 = scmp.eq.s32.totalorder %s19, 1
    %p168 = por %p166, %p167
    %p170 = scmp.ne.s32.totalorder %s155, %s169
    %p171 = scmp.eq.s32.totalorder %s19, 0
    %p172 = por %p170, %p171
    %s173 = ssub.s32 %s13, %s20
    %p174 = scmp.eq.s32.totalorder %s173, 0
    %s176 = sadd.s32 %s175, 1
    %s177 = scalar_select %p174, %s175, %s176
    %p180 = pneg %p174
    %p181 = scmp.eq.s32.totalorder %s13, 1
    %p182 = por %p180, %p181
    %p183 = scmp.ne.s32.totalorder %s175, %s178
    %p184 = scmp.eq.s32.totalorder %s13, 0
    %p185 = por %p183, %p184
    %p186 = scmp.ne.s32.totalorder %s175, %s178
    %p187 = scmp.eq.s32.totalorder %s18, 1
    %p188 = por %p186, %p187
    %p189 = scmp.ne.s32.totalorder %s178, %s179
    %p190 = scmp.eq.s32.totalorder %s18, 0
    %p191 = por %p189, %p190
    %p192 = scmp.ne.s32.totalorder %s178, %s179
    %p193 = scmp.eq.s32.totalorder %s19, 1
    %p194 = por %p192, %p193
    %p196 = scmp.ne.s32.totalorder %s179, %s195
    %p197 = scmp.eq.s32.totalorder %s19, 0
    %p198 = por %p196, %p197
    %p199 = scmp.le.s32.totalorder 1, %s13
    %p200 = scmp.lt.s32.totalorder %s13, 3
    %p201 = pnand %p199, %p200
    %p202 = pneg %p201
    // Predicated region
    $region9: #{dqn_forward.1} parent=5 // pred_check
      _
    $region10: #{dqn_forward.1} parent=5 // pred_check_branch
      %204 = sbr.rel (%p201) target = $region12
    $region11: #{dqn_forward.1} parent=5 // pred_region
      %s205 = ssub.s32 %s13, 1
      // Predicated region
      $region13: #{dqn_forward.1} parent=11 // pred_check
        %p206 = pneg %p60
      $region14: #{dqn_forward.1} parent=11 // pred_check_branch
        %208 = sbr.rel (%p206) target = $region16
      $region15: #{dqn_forward.1} parent=11 // pred_region
        _
      $region16: #{dqn_forward.1} parent=11 // pred_fallthru
        _
      // Predicated region
      $region17: #{dqn_forward.1} parent=11 // pred_check
        %p209 = pneg %p81
      $region18: #{dqn_forward.1} parent=11 // pred_check_branch
        %211 = sbr.rel (%p209) target = $region20
      $region19: #{dqn_forward.1} parent=11 // pred_region
        _
      $region20: #{dqn_forward.1} parent=11 // pred_fallthru
        _
      // Predicated region
      $region21: #{dqn_forward.1} parent=11 // pred_check
        %p212 = pneg %p102
      $region22: #{dqn_forward.1} parent=11 // pred_check_branch
        %214 = sbr.rel (%p212) target = $region24
      $region23: #{dqn_forward.1} parent=11 // pred_region
        _
      $region24: #{dqn_forward.1} parent=11 // pred_fallthru
        _
      // Predicated region
      $region25: #{dqn_forward.1} parent=11 // pred_check
        %p215 = pneg %p123
      $region26: #{dqn_forward.1} parent=11 // pred_check_branch
        %217 = sbr.rel (%p215) target = $region28
      $region27: #{dqn_forward.1} parent=11 // pred_region
        _
      $region28: #{dqn_forward.1} parent=11 // pred_fallthru
        _
      // Predicated region
      $region29: #{dqn_forward.1} parent=11 // pred_check
        %p218 = pneg %p144
      $region30: #{dqn_forward.1} parent=11 // pred_check_branch
        %220 = sbr.rel (%p218) target = $region32
      $region31: #{dqn_forward.1} parent=11 // pred_region
        _
      $region32: #{dqn_forward.1} parent=11 // pred_fallthru
        _
      // Predicated region
      $region33: #{dqn_forward.1} parent=11 // pred_check
        %p221 = pneg %p165
      $region34: #{dqn_forward.1} parent=11 // pred_check_branch
        %223 = sbr.rel (%p221) target = $region36
      $region35: #{dqn_forward.1} parent=11 // pred_region
        _
      $region36: #{dqn_forward.1} parent=11 // pred_fallthru
        _
    $region12: #{dqn_forward.1} parent=5 // pred_fallthru
      _
    %p224 = scmp.lt.s32.totalorder %s13, 2
    // Predicated region
    $region37: #{dqn_forward.1} parent=5 // pred_check
      %p225 = pneg %p224
    $region38: #{dqn_forward.1} parent=5 // pred_check_branch
      %227 = sbr.rel (%p225) target = $region40
    $region39: #{dqn_forward.1} parent=5 // pred_region
      // Predicated region
      $region41: #{dqn_forward.1} parent=39 // pred_check
        %p228 = pneg %p33
      $region42: #{dqn_forward.1} parent=39 // pred_check_branch
        %230 = sbr.rel (%p228) target = $region44
      $region43: #{dqn_forward.1} parent=39 // pred_region
        %s231 = smul.u32 4, %s13
        %p232 = scmp.lt.s32.totalorder %s231, 7
        %s233 = scalar_select %p232, %s231, 7
        %s234 = smul.addr %s233, 8
        %s235 = scalar_lea.vmem %s0, %s234
        %s236 = smul.u32 4, %s13
      $region44: #{dqn_forward.1} parent=39 // pred_fallthru
        _
    $region40: #{dqn_forward.1} parent=5 // pred_fallthru
      _
    %p237 = scmp.le.s32.totalorder 1, %s13
    %p238 = scmp.lt.s32.totalorder %s13, 3
    %p239 = pnand %p237, %p238
    %p240 = pneg %p239
    // Predicated region
    $region45: #{dqn_forward.1} parent=5 // pred_check
      _
    $region46: #{dqn_forward.1} parent=5 // pred_check_branch
      %242 = sbr.rel (%p239) target = $region48
    $region47: #{dqn_forward.1} parent=5 // pred_region
      %s243 = ssub.s32 %s13, 1
      %s244 = smul.u32 4, %s18
      %p245 = scmp.lt.s32.totalorder %s244, 7
      %s246 = scalar_select %p245, %s244, 7
      %s247 = smul.addr %s246, 8
      %s248 = scalar_lea.vmem %s0, %s247
      %p249 = pneg %p39
      %p250 = pneg %p36
      %p251 = pneg %p60
      %p252 = pneg %p57
      %p253 = pneg %p81
      %p254 = pneg %p78
      %p255 = pneg %p102
      %p256 = pneg %p99
      %p257 = pneg %p123
      %p258 = pneg %p120
      %p259 = pneg %p144
      %p260 = pneg %p141
      %p261 = pneg %p165
      %p262 = pneg %p162
      %p263 = pneg %p191
      %p264 = pneg %p188
      %s265 = smul.u32 4, %s18
      %p266 = scmp.lt.s32.totalorder %s265, 7
      %s267 = scalar_select %p266, %s265, 7
      %s268 = smul.addr %s267, 8
      %s269 = scalar_lea.vmem %s7, %s268
      %s270 = smul.u32 4, %s18
      %p271 = scmp.lt.s32.totalorder %s270, 7
      %s272 = scalar_select %p271, %s270, 7
      %s273 = smul.addr %s272, 8
      %s274 = scalar_lea.vmem %s0, %s273
      %s275 = smul.u32 4, %s18
      %s276 = smul.u32 4, %s18
      %p277 = scmp.lt.s32.totalorder %s276, 7
      %s278 = scalar_select %p277, %s276, 7
      %s279 = smul.addr %s278, 8
      %s280 = scalar_lea.vmem %s7, %s279
      %s281 = smul.u32 4, %s18
      %v283 = vld [vmem:[%s274] sm:$0xff]
      %v284 = vld [vmem:[%s274 + $0x8] sm:$0xff]
      %v285 = vld [vmem:[%s274 + $0x10] sm:$0xff]
      %v286 = vld [vmem:[%s274 + $0x18] sm:$0xff]
      %v287 = vpack.c.bf16 %v284, %v283
      %v288 = vpack.c.bf16 %v286, %v285
      %v289 = vld [vmem:[%s1] sm:$0xf]
      %v290 = vld [vmem:[%s1 + $0x4] sm:$0xf]
      %v291 = vld [vmem:[%s2] sm:$0x1]
      %v293 = vlaneseq
      %v294 = vshrl.u32 %v293, 7
      %v295 = vsub.s32 0, %v294
      %v296 = vrot.slane %v291, %v295
      %v300 = vunpack.c.l.b16 %v289
      %v301 = vunpack.c.l.b16 %v290
      %v302 = vpack.c.b16 %v301, %v300
      %vm304 = vcmask 130048
      %v306 = vsel %vm304, %v287, 0
      %v309 = vsel %vm304, %v288, 0
      %311 = vmatprep.subr.bf16.mxu0 0
      %312 = vmatpush1.bf16.msra.mxu0 %v302
      %313 = vmatprep.subr.bf16.mxu0 0
      %314 = vmatpush1.bf16.msra.mxu0 0
      %315 = vmatprep.subr.bf16.mxu0 0
      %316 = vmatpush1.bf16.msra.mxu0 0
      %317 = vmatprep.subr.bf16.mxu0 0
      %318 = vmatpush1.bf16.msra.mxu0 0
      %319 = vmatprep.subr.bf16.mxu0 0
      %320 = vmatpush1.bf16.msra.mxu0 0
      %321 = vmatprep.subr.bf16.mxu0 0
      %322 = vmatpush1.bf16.msra.mxu0 0
      %323 = vmatprep.subr.bf16.mxu0 0
      %324 = vmatpush1.bf16.msra.mxu0 0
      %325 = vmatprep.subr.bf16.mxu0 0
      %326 = vmatpush1.bf16.msra.mxu0 0
      %327 = vmatprep.subr.bf16.mxu0 0
      %328 = vmatpush1.bf16.msra.mxu0 0
      %329 = vmatprep.subr.bf16.mxu0 0
      %330 = vmatpush1.bf16.msra.mxu0 0
      %331 = vmatprep.subr.bf16.mxu0 0
      %332 = vmatpush1.bf16.msra.mxu0 0
      %333 = vmatprep.subr.bf16.mxu0 0
      %334 = vmatpush1.bf16.msra.mxu0 0
      %335 = vmatprep.subr.bf16.mxu0 0
      %336 = vmatpush1.bf16.msra.mxu0 0
      %337 = vmatprep.subr.bf16.mxu0 0
      %338 = vmatpush1.bf16.msra.mxu0 0
      %339 = vmatprep.subr.bf16.mxu0 0
      %340 = vmatpush1.bf16.msra.mxu0 0
      %341 = vmatprep.subr.bf16.mxu0 0
      %342 = vmatpush1.bf16.msra.mxu0 0
      %343 = vmatprep.mubr.bf16.mxu0 0
      %344 = vmatmul.mubr.bf16.gmra.mrb[0].mxu0 %v306
      %v345 = vpop.f32.mrb[0].mxu0
      %v346 = vadd.f32 %v296, %v345
      %v347 = vpop.f32.mrb[0].mxu0
      %v348 = vpop.f32.mrb[0].mxu0
      %v349 = vadd.f32 %v296, %v348
      %v350 = vpop.f32.mrb[0].mxu0
      %351 = vmatprep.mubr.bf16.mxu0 0
      %352 = vmatmul.mubr.bf16.gmra.mrb[0].mxu0 %v309
      %v353 = vpop.f32.mrb[0].mxu0
      %v354 = vadd.f32 %v296, %v353
      %v355 = vpop.f32.mrb[0].mxu0
      %v356 = vpop.f32.mrb[0].mxu0
      %v357 = vadd.f32 %v296, %v356
      %v358 = vpop.f32.mrb[0].mxu0
      %359 = vdwg.mxu0
      %v360 = vmax.f32 %v346, 0.0
      %v361 = vmax.f32 %v349, 0.0
      %v362 = vmax.f32 %v354, 0.0
      %v363 = vmax.f32 %v357, 0.0
      %v364 = vpack.c.bf16 %v361, %v360
      %v365 = vpack.c.bf16 %v363, %v362
      %v366 = vld [vmem:[%s3] sm:$0xf]
      %v367 = vld [vmem:[%s3 + $0x4] sm:$0xf]
      %v368 = vld [vmem:[%s3 + $0x8] sm:$0xf]
      %v369 = vld [vmem:[%s3 + $0xc] sm:$0xf]
      %v370 = vld [vmem:[%s3 + $0x10] sm:$0xf]
      %v371 = vld [vmem:[%s3 + $0x14] sm:$0xf]
      %v372 = vld [vmem:[%s3 + $0x18] sm:$0xf]
      %v373 = vld [vmem:[%s3 + $0x1c] sm:$0xf]
      %v374 = vld [vmem:[%s3 + $0x20] sm:$0xf]
      %v375 = vld [vmem:[%s3 + $0x24] sm:$0xf]
      %v376 = vld [vmem:[%s3 + $0x28] sm:$0xf]
      %v377 = vld [vmem:[%s3 + $0x2c] sm:$0xf]
      %v378 = vld [vmem:[%s3 + $0x30] sm:$0xf]
      %v379 = vld [vmem:[%s3 + $0x34] sm:$0xf]
      %v380 = vld [vmem:[%s3 + $0x38] sm:$0xf]
      %v381 = vld [vmem:[%s3 + $0x3c] sm:$0xf]
      %v382 = vld [vmem:[%s4] sm:$0x1]
      %v384 = vlaneseq
      %v385 = vshrl.u32 %v384, 7
      %v386 = vsub.s32 0, %v385
      %v387 = vrot.slane %v382, %v386
      %v405 = vunpack.c.l.b16 %v366
      %v406 = vunpack.c.l.b16 %v367
      %v407 = vunpack.c.l.b16 %v368
      %v408 = vunpack.c.l.b16 %v369
      %v409 = vunpack.c.l.b16 %v370
      %v410 = vunpack.c.l.b16 %v371
      %v411 = vunpack.c.l.b16 %v372
      %v412 = vunpack.c.l.b16 %v373
      %v413 = vunpack.c.l.b16 %v374
      %v414 = vunpack.c.l.b16 %v375
      %v415 = vunpack.c.l.b16 %v376
      %v416 = vunpack.c.l.b16 %v377
      %v417 = vunpack.c.l.b16 %v378
      %v418 = vunpack.c.l.b16 %v379
      %v419 = vunpack.c.l.b16 %v380
      %v420 = vunpack.c.l.b16 %v381
      %v421 = vpack.c.b16 %v406, %v405
      %v422 = vpack.c.b16 %v408, %v407
      %v423 = vpack.c.b16 %v410, %v409
      %v424 = vpack.c.b16 %v412, %v411
      %v425 = vpack.c.b16 %v414, %v413
      %v426 = vpack.c.b16 %v416, %v415
      %v427 = vpack.c.b16 %v418, %v417
      %v428 = vpack.c.b16 %v420, %v419
      %437 = vmatprep.subr.bf16.mxu0 0
      %438 = vmatpush1.bf16.msra.mxu0 %v421
      %439 = vmatprep.subr.bf16.mxu0 0
      %440 = vmatpush1.bf16.msra.mxu0 %v422
      %441 = vmatprep.subr.bf16.mxu0 0
      %442 = vmatpush1.bf16.msra.mxu0 %v423
      %443 = vmatprep.subr.bf16.mxu0 0
      %444 = vmatpush1.bf16.msra.mxu0 %v424
      %445 = vmatprep.subr.bf16.mxu0 0
      %446 = vmatpush1.bf16.msra.mxu0 %v425
      %447 = vmatprep.subr.bf16.mxu0 0
      %448 = vmatpush1.bf16.msra.mxu0 %v426
      %449 = vmatprep.subr.bf16.mxu0 0
      %450 = vmatpush1.bf16.msra.mxu0 %v427
      %451 = vmatprep.subr.bf16.mxu0 0
      %452 = vmatpush1.bf16.msra.mxu0 %v428
      %453 = vmatprep.subr.bf16.mxu0 0
      %454 = vmatpush1.bf16.msra.mxu0 0
      %455 = vmatprep.subr.bf16.mxu0 0
      %456 = vmatpush1.bf16.msra.mxu0 0
      %457 = vmatprep.subr.bf16.mxu0 0
      %458 = vmatpush1.bf16.msra.mxu0 0
      %459 = vmatprep.subr.bf16.mxu0 0
      %460 = vmatpush1.bf16.msra.mxu0 0
      %461 = vmatprep.subr.bf16.mxu0 0
      %462 = vmatpush1.bf16.msra.mxu0 0
      %463 = vmatprep.subr.bf16.mxu0 0
      %464 = vmatpush1.bf16.msra.mxu0 0
      %465 = vmatprep.subr.bf16.mxu0 0
      %466 = vmatpush1.bf16.msra.mxu0 0
      %467 = vmatprep.subr.bf16.mxu0 0
      %468 = vmatpush1.bf16.msra.mxu0 0
      %469 = vmatprep.mubr.bf16.mxu0 0
      %470 = vmatmul.mubr.bf16.gmra.mrb[0].mxu0 %v364
      %v471 = vpop.f32.mrb[0].mxu0
      %v472 = vadd.f32 %v387, %v471
      %v473 = vpop.f32.mrb[0].mxu0
      %v474 = vpop.f32.mrb[0].mxu0
      %v475 = vadd.f32 %v387, %v474
      %v476 = vpop.f32.mrb[0].mxu0
      %477 = vmatprep.mubr.bf16.mxu0 0
      %478 = vmatmul.mubr.bf16.gmra.mrb[0].mxu0 %v365
      %v479 = vpop.f32.mrb[0].mxu0
      %v480 = vadd.f32 %v387, %v479
      %v481 = vpop.f32.mrb[0].mxu0
      %v482 = vpop.f32.mrb[0].mxu0
      %v483 = vadd.f32 %v387, %v482
      %v484 = vpop.f32.mrb[0].mxu0
      %485 = vdwg.mxu0
      %v486 = vmax.f32 %v472, 0.0
      %v487 = vmax.f32 %v475, 0.0
      %v488 = vmax.f32 %v480, 0.0
      %v489 = vmax.f32 %v483, 0.0
      %v490 = vpack.c.bf16 %v487, %v486
      %v491 = vpack.c.bf16 %v489, %v488
      %v492 = vld [vmem:[%s5] sm:$0xf]
      %v493 = vld [vmem:[%s5 + $0x4] sm:$0xf]
      %v494 = vld [vmem:[%s5 + $0x8] sm:$0xf]
      %v495 = vld [vmem:[%s5 + $0xc] sm:$0xf]
      %v496 = vld [vmem:[%s5 + $0x10] sm:$0xf]
      %v497 = vld [vmem:[%s5 + $0x14] sm:$0xf]
      %v498 = vld [vmem:[%s5 + $0x18] sm:$0xf]
      %v499 = vld [vmem:[%s5 + $0x1c] sm:$0xf]
      %v500 = vld [vmem:[%s5 + $0x20] sm:$0xf]
      %v501 = vld [vmem:[%s5 + $0x24] sm:$0xf]
      %v502 = vld [vmem:[%s5 + $0x28] sm:$0xf]
      %v503 = vld [vmem:[%s5 + $0x2c] sm:$0xf]
      %v504 = vld [vmem:[%s5 + $0x30] sm:$0xf]
      %v505 = vld [vmem:[%s5 + $0x34] sm:$0xf]
      %v506 = vld [vmem:[%s5 + $0x38] sm:$0xf]
      %v507 = vld [vmem:[%s5 + $0x3c] sm:$0xf]
      %v508 = vld [vmem:[%s6] sm:$0x1]
      %v510 = vlaneseq
      %v511 = vshrl.u32 %v510, 7
      %v512 = vsub.s32 0, %v511
      %v513 = vrot.slane %v508, %v512
      %v531 = vunpack.c.l.b16 %v492
      %v532 = vunpack.c.l.b16 %v493
      %v533 = vunpack.c.l.b16 %v494
      %v534 = vunpack.c.l.b16 %v495
      %v535 = vunpack.c.l.b16 %v496
      %v536 = vunpack.c.l.b16 %v497
      %v537 = vunpack.c.l.b16 %v498
      %v538 = vunpack.c.l.b16 %v499
      %v539 = vunpack.c.l.b16 %v500
      %v540 = vunpack.c.l.b16 %v501
      %v541 = vunpack.c.l.b16 %v502
      %v542 = vunpack.c.l.b16 %v503
      %v543 = vunpack.c.l.b16 %v504
      %v544 = vunpack.c.l.b16 %v505
      %v545 = vunpack.c.l.b16 %v506
      %v546 = vunpack.c.l.b16 %v507
      %v547 = vpack.c.b16 %v532, %v531
      %v548 = vpack.c.b16 %v534, %v533
      %v549 = vpack.c.b16 %v536, %v535
      %v550 = vpack.c.b16 %v538, %v537
      %v551 = vpack.c.b16 %v540, %v539
      %v552 = vpack.c.b16 %v542, %v541
      %v553 = vpack.c.b16 %v544, %v543
      %v554 = vpack.c.b16 %v546, %v545
      %563 = vmatprep.subr.bf16.mxu0 0
      %564 = vmatpush1.bf16.msra.mxu0 %v547
      %565 = vmatprep.subr.bf16.mxu0 0
      %566 = vmatpush1.bf16.msra.mxu0 %v548
      %567 = vmatprep.subr.bf16.mxu0 0
      %568 = vmatpush1.bf16.msra.mxu0 %v549
      %569 = vmatprep.subr.bf16.mxu0 0
      %570 = vmatpush1.bf16.msra.mxu0 %v550
      %571 = vmatprep.subr.bf16.mxu0 0
      %572 = vmatpush1.bf16.msra.mxu0 %v551
      %573 = vmatprep.subr.bf16.mxu0 0
      %574 = vmatpush1.bf16.msra.mxu0 %v552
      %575 = vmatprep.subr.bf16.mxu0 0
      %576 = vmatpush1.bf16.msra.mxu0 %v553
      %577 = vmatprep.subr.bf16.mxu0 0
      %578 = vmatpush1.bf16.msra.mxu0 %v554
      %579 = vmatprep.subr.bf16.mxu0 0
      %580 = vmatpush1.bf16.msra.mxu0 0
      %581 = vmatprep.subr.bf16.mxu0 0
      %582 = vmatpush1.bf16.msra.mxu0 0
      %583 = vmatprep.subr.bf16.mxu0 0
      %584 = vmatpush1.bf16.msra.mxu0 0
      %585 = vmatprep.subr.bf16.mxu0 0
      %586 = vmatpush1.bf16.msra.mxu0 0
      %587 = vmatprep.subr.bf16.mxu0 0
      %588 = vmatpush1.bf16.msra.mxu0 0
      %589 = vmatprep.subr.bf16.mxu0 0
      %590 = vmatpush1.bf16.msra.mxu0 0
      %591 = vmatprep.subr.bf16.mxu0 0
      %592 = vmatpush1.bf16.msra.mxu0 0
      %593 = vmatprep.subr.bf16.mxu0 0
      %594 = vmatpush1.bf16.msra.mxu0 0
      %595 = vmatprep.mubr.bf16.mxu0 0
      %596 = vmatmul.mubr.bf16.gmra.mrb[0].mxu0 %v490
      %v597 = vpop.f32.mrb[0].mxu0
      %v598 = vadd.f32 %v513, %v597
      %v599 = vpop.f32.mrb[0].mxu0
      %v600 = vpop.f32.mrb[0].mxu0
      %v601 = vadd.f32 %v513, %v600
      %v602 = vpop.f32.mrb[0].mxu0
      %603 = vmatprep.mubr.bf16.mxu0 0
      %604 = vmatmul.mubr.bf16.gmra.mrb[0].mxu0 %v491
      %v605 = vpop.f32.mrb[0].mxu0
      %v606 = vadd.f32 %v513, %v605
      %v607 = vpop.f32.mrb[0].mxu0
      %v608 = vpop.f32.mrb[0].mxu0
      %v609 = vadd.f32 %v513, %v608
      %v610 = vpop.f32.mrb[0].mxu0
      %611 = vdwg.mxu0
      %vm612 = vcmask 31744
      %613 = vst.msk [vmem:[%s280] sm:$0xff] %vm612, %v598
      %614 = vst.msk [vmem:[%s280 + $0x8] sm:$0xff] %vm612, %v601
      %615 = vst.msk [vmem:[%s280 + $0x10] sm:$0xff] %vm612, %v606
      %616 = vst.msk [vmem:[%s280 + $0x18] sm:$0xff] %vm612, %v609
      %s617 = smul.u32 4, %s18
      %p618 = scmp.lt.s32.totalorder %s617, 7
      %s619 = scalar_select %p618, %s617, 7
      %s620 = smul.addr %s619, 8
      %s621 = scalar_lea.vmem %s7, %s620
      // Predicated region
      $region49: #{dqn_forward.1} parent=47 // pred_check
        %p622 = pneg %p188
      $region50: #{dqn_forward.1} parent=47 // pred_check_branch
        %624 = sbr.rel (%p622) target = $region52
      $region51: #{dqn_forward.1} parent=47 // pred_region
        %s625 = smul.u32 4, %s18
      $region52: #{dqn_forward.1} parent=47 // pred_fallthru
        _
    $region48: #{dqn_forward.1} parent=5 // pred_fallthru
      _
    %p626 = scmp.le.s32.totalorder 2, %s13
    // Predicated region
    $region53: #{dqn_forward.1} parent=5 // pred_check
      %p627 = pneg %p626
    $region54: #{dqn_forward.1} parent=5 // pred_check_branch
      %629 = sbr.rel (%p627) target = $region56
    $region55: #{dqn_forward.1} parent=5 // pred_region
      %s630 = ssub.s32 %s13, 2
      // Predicated region
      $region57: #{dqn_forward.1} parent=55 // pred_check
        %p631 = pneg %p194
      $region58: #{dqn_forward.1} parent=55 // pred_check_branch
        %633 = sbr.rel (%p631) target = $region60
      $region59: #{dqn_forward.1} parent=55 // pred_region
        %s634 = smul.u32 4, %s19
        %p635 = scmp.lt.s32.totalorder %s634, 7
        %s636 = scalar_select %p635, %s634, 7
        %s637 = smul.addr %s636, 8
        %s638 = scalar_lea.vmem %s7, %s637
      $region60: #{dqn_forward.1} parent=55 // pred_fallthru
        _
    $region56: #{dqn_forward.1} parent=5 // pred_fallthru
      _
  $region6: #{dqn_forward.1} parent=0 // loop_footer
    %s17 = sadd.s32 1, %s13
  $region7: #{dqn_forward.1} parent=0 // loop_footer_branch
    %12 = sbr.rel target = $region3
  $region8: #{dqn_forward.1} parent=0 // loop_exit
    _

</llo_original>
